<compile_context>
chip_gen: v7x
topology: tpu7x:2x2x1
jax: 0.10.0
libtpu: 0.0.40
codegen_flags: <defaults>
</compile_context>

<pallas_src>
import jax
import jax.numpy as jnp
from jax.experimental import pallas as pl
from jax.experimental.pallas import tpu as pltpu

LAYER_NORM_EPS = 1e-12


def _round_up(x, m):
    return (x + m - 1) // m * m


def _gelu(x):
    # exact (erf-based) gelu, matching the BERT reference `gelu`
    return 0.5 * x * (1.0 + jax.lax.erf(x * (1.0 / jnp.sqrt(2.0)).astype(x.dtype)))


def lm_head_kernel(x_ref, w1_ref, b1_ref, gamma_ref, beta_ref,
                   wd_ref, bd_ref, out_ref, h_ref):
    # grid = (num_m_tiles, num_vocab_tiles); vocab axis is innermost.
    # Transform is computed once per M-tile and cached in VMEM scratch.
    @pl.when(pl.program_id(1) == 0)
    def _():
        x = x_ref[...].astype(jnp.bfloat16)
        h = jnp.dot(x, w1_ref[...], preferred_element_type=jnp.float32)
        h = h + b1_ref[...]
        h = _gelu(h)
        mu = jnp.mean(h, axis=-1, keepdims=True)
        var = jnp.mean(jnp.square(h - mu), axis=-1, keepdims=True)
        h = (h - mu) * jax.lax.rsqrt(var + LAYER_NORM_EPS)
        h = h * gamma_ref[...] + beta_ref[...]
        h_ref[...] = h.astype(jnp.bfloat16)

    # Decoder matmul on the current (H, tile_n) vocab slab.
    out_ref[...] = (
        jnp.dot(h_ref[...], wd_ref[...], preferred_element_type=jnp.float32)
        + bd_ref[...]
    ).astype(out_ref.dtype)


def bert_lm_prediction_head(hidden_states, params, *, tile_m=256, tile_n=512):
    """hidden_states: [..., H] -> prediction scores [..., V]."""
    *lead, H = hidden_states.shape
    x = hidden_states.reshape(-1, H)
    M = x.shape[0]
    V = params["decoder_w"].shape[1]

    # Clamp tiles to (padded) problem size; keep (8, 128) legality.
    tile_m = max(8, min(tile_m, _round_up(M, 8)))
    tile_n = max(128, min(tile_n, _round_up(V, 128)))
    M_pad = _round_up(M, tile_m)
    V_pad = _round_up(V, tile_n)

    x_p = jnp.pad(x, ((0, M_pad - M), (0, 0))) if M_pad != M else x

    # bf16 matmul operands (MXU throughput + halved weight DMA traffic);
    # biases / LayerNorm params stay f32.
    dense_w = params["dense_w"].astype(jnp.bfloat16)
    dense_b = params["dense_b"].reshape(1, H).astype(jnp.float32)
    gamma = params["ln_gamma"].reshape(1, H).astype(jnp.float32)
    beta = params["ln_beta"].reshape(1, H).astype(jnp.float32)
    dec_w = params["decoder_w"].astype(jnp.bfloat16)
    dec_b = params["decoder_b"].reshape(1, V).astype(jnp.float32)
    if V_pad != V:
        dec_w = jnp.pad(dec_w, ((0, 0), (0, V_pad - V)))
        dec_b = jnp.pad(dec_b, ((0, 0), (0, V_pad - V)))

    grid = (M_pad // tile_m, V_pad // tile_n)

    cost = pl.CostEstimate(
        flops=2 * M_pad * H * H + 2 * M_pad * H * V_pad,
        transcendentals=M_pad * H,
        bytes_accessed=(x_p.size * 4                     # activations in
                        + dense_w.size * 2               # transform W (bf16)
                        + dec_w.size * 2 * grid[0]       # decoder W streamed per M-tile
                        + (dense_b.size + gamma.size + beta.size + dec_b.size) * 4
                        + M_pad * V_pad * 4),            # logits out
    )

    logits = pl.pallas_call(
        lm_head_kernel,
        out_shape=jax.ShapeDtypeStruct((M_pad, V_pad), jnp.float32),
        grid_spec=pltpu.PrefetchScalarGridSpec(
            num_scalar_prefetch=0,
            grid=grid,
            in_specs=[
                pl.BlockSpec((tile_m, H), lambda i, j: (i, 0)),   # x tile
                pl.BlockSpec((H, H), lambda i, j: (0, 0)),        # transform.dense W (bf16)
                pl.BlockSpec((1, H), lambda i, j: (0, 0)),        # transform.dense b
                pl.BlockSpec((1, H), lambda i, j: (0, 0)),        # LayerNorm gamma
                pl.BlockSpec((1, H), lambda i, j: (0, 0)),        # LayerNorm beta
                pl.BlockSpec((H, tile_n), lambda i, j: (0, j)),   # decoder W slab (bf16)
                pl.BlockSpec((1, tile_n), lambda i, j: (0, j)),   # decoder bias slab
            ],
            out_specs=pl.BlockSpec((tile_m, tile_n), lambda i, j: (i, j)),
            scratch_shapes=[pltpu.VMEM((tile_m, H), jnp.bfloat16)],  # cached transform
        ),
        compiler_params=pltpu.CompilerParams(
            dimension_semantics=("parallel", "arbitrary")),
        cost_estimate=cost,
    )(x_p, dense_w, dense_b, gamma, beta, dec_w, dec_b)

    logits = logits[:M, :V]
    return logits.reshape(*lead, V)


def init_params(key, hidden_size, vocab_size):
    ks = jax.random.split(key, 4)
    scale = 0.02
    return {
        # BertPredictionHeadTransform.dense: Linear(H, H)
        "dense_w": scale * jax.random.normal(ks[0], (hidden_size, hidden_size), jnp.float32),
        "dense_b": scale * jax.random.normal(ks[1], (hidden_size,), jnp.float32),
        # BertPredictionHeadTransform.LayerNorm
        "ln_gamma": jnp.ones((hidden_size,), jnp.float32),
        "ln_beta": jnp.zeros((hidden_size,), jnp.float32),
        # BertLMPredictionHead.decoder: Linear(H, V, bias=False) + tied bias param
        "decoder_w": scale * jax.random.normal(ks[2], (hidden_size, vocab_size), jnp.float32),
        "decoder_b": jnp.zeros((vocab_size,), jnp.float32),  # nn.Parameter(torch.zeros(V))
    }


def _reference(hidden_states, params):
    h = hidden_states @ params["dense_w"] + params["dense_b"]
    h = _gelu(h)
    mu = h.mean(-1, keepdims=True)
    var = ((h - mu) ** 2).mean(-1, keepdims=True)
    h = (h - mu) / jnp.sqrt(var + LAYER_NORM_EPS)
    h = h * params["ln_gamma"] + params["ln_beta"]
    return h @ params["decoder_w"] + params["decoder_b"]


if __name__ == "__main__":
    # Small shapes; chosen so the grid exercises multiple M tiles, multiple
    # vocab tiles, and the M/V zero-padding paths.
    B, S, H, V = 2, 12, 128, 200

    key = jax.random.PRNGKey(0)
    k_seq, k_param = jax.random.split(key, 2)

    hidden_states = jax.random.normal(k_seq, (B, S, H), jnp.float32)
    params = init_params(k_param, H, V)

    scores = bert_lm_prediction_head(hidden_states, params,
                                     tile_m=16, tile_n=128)
    jax.block_until_ready(scores)

    ref = _reference(hidden_states, params)
    assert scores.shape == (B, S, V)
    # bf16 matmul operands vs. an f32 reference -> looser tolerance.
    assert jnp.allclose(scores, ref, atol=5e-2, rtol=5e-2)

    print("KERNEL_OK")
</pallas_src>

<mosaic_0001>
module attributes {stable_mosaic.version = 11 : i64} {
  func.func @lm_head_kernel(%arg0: i32, %arg1: i32, %arg2: memref<16x128xf32, #tpu.memory_space<vmem>>, %arg3: memref<128x128xbf16, #tpu.memory_space<vmem>>, %arg4: memref<1x128xf32, #tpu.memory_space<vmem>>, %arg5: memref<1x128xf32, #tpu.memory_space<vmem>>, %arg6: memref<1x128xf32, #tpu.memory_space<vmem>>, %arg7: memref<128x128xbf16, #tpu.memory_space<vmem>>, %arg8: memref<1x128xf32, #tpu.memory_space<vmem>>, %arg9: memref<16x128xf32, #tpu.memory_space<vmem>>, %arg10: memref<16x128xbf16, #tpu.memory_space<vmem>>) attributes {dimension_semantics = [#tpu.dimension_semantics<parallel>, #tpu.dimension_semantics<arbitrary>], iteration_bounds = array<i64: 2, 2>, scalar_prefetch = 0 : i64, scratch_operands = 1 : i64, tpu.core_type = #tpu.core_type<tc>, window_params = [{transform_indices = @transform_0, window_bounds = array<i64: 16, 128>}, {pipeline_mode = #tpu.pipeline_mode<synchronous>, transform_indices = @transform_1, window_bounds = array<i64: 128, 128>}, {pipeline_mode = #tpu.pipeline_mode<synchronous>, transform_indices = @transform_2, window_bounds = array<i64: 1, 128>}, {pipeline_mode = #tpu.pipeline_mode<synchronous>, transform_indices = @transform_3, window_bounds = array<i64: 1, 128>}, {pipeline_mode = #tpu.pipeline_mode<synchronous>, transform_indices = @transform_4, window_bounds = array<i64: 1, 128>}, {transform_indices = @transform_5, window_bounds = array<i64: 128, 128>}, {transform_indices = @transform_6, window_bounds = array<i64: 1, 128>}, {transform_indices = @transform_7, window_bounds = array<i64: 16, 128>}]} {
    %c0_i32 = arith.constant 0 : i32
    %0 = arith.cmpi eq, %arg1, %c0_i32 : i32
    %1 = arith.extui %0 : i1 to i32
    %c0_i32_0 = arith.constant 0 : i32
    %2 = arith.cmpi ne, %1, %c0_i32_0 : i32
    scf.if %2 {
      %c0_8 = arith.constant 0 : index
      %c0_9 = arith.constant 0 : index
      %10 = vector.load %arg2[%c0_8, %c0_9] : memref<16x128xf32, #tpu.memory_space<vmem>>, vector<16x128xf32>
      %11 = arith.truncf %10 : vector<16x128xf32> to vector<16x128xbf16>
      %c0_10 = arith.constant 0 : index
      %c0_11 = arith.constant 0 : index
      %12 = vector.load %arg3[%c0_10, %c0_11] : memref<128x128xbf16, #tpu.memory_space<vmem>>, vector<128x128xbf16>
      %cst_12 = arith.constant dense<0.000000e+00> : vector<16x128xf32>
      %13 = tpu.matmul %11, %12, %cst_12 {dimension_numbers = #tpu.dot_dimension_numbers<[1], [0], [0], [1], [0, 0, 1, 1], [], []>} : vector<16x128xbf16>, vector<128x128xbf16>, vector<16x128xf32> -> vector<16x128xf32>
      %c0_13 = arith.constant 0 : index
      %c0_14 = arith.constant 0 : index
      %14 = vector.load %arg4[%c0_13, %c0_14] : memref<1x128xf32, #tpu.memory_space<vmem>>, vector<1x128xf32>
      %15 = vector.broadcast %14 : vector<1x128xf32> to vector<16x128xf32>
      %16 = arith.addf %13, %15 : vector<16x128xf32>
      %cst_15 = arith.constant 5.000000e-01 : f32
      %17 = vector.broadcast %cst_15 : f32 to vector<16x128xf32>
      %18 = arith.mulf %17, %16 : vector<16x128xf32>
      %cst_16 = arith.constant 2.000000e+00 : f32
      %19 = math.sqrt %cst_16 : f32
      %cst_17 = arith.constant 1.000000e+00 : f32
      %20 = arith.divf %cst_17, %19 : f32
      %21 = vector.broadcast %20 : f32 to vector<16x128xf32>
      %22 = arith.mulf %16, %21 : vector<16x128xf32>
      %23 = math.erf %22 : vector<16x128xf32>
      %cst_18 = arith.constant 1.000000e+00 : f32
      %24 = vector.broadcast %cst_18 : f32 to vector<16x128xf32>
      %25 = arith.addf %24, %23 : vector<16x128xf32>
      %26 = arith.mulf %18, %25 : vector<16x128xf32>
      %cst_19 = arith.constant dense<0.000000e+00> : vector<16xf32>
      %27 = vector.multi_reduction <add>, %26, %cst_19 [1] : vector<16x128xf32> to vector<16xf32>
      %28 = vector.shape_cast %27 : vector<16xf32> to vector<16x1xf32>
      %cst_20 = arith.constant 1.280000e+02 : f32
      %29 = vector.broadcast %cst_20 : f32 to vector<16x1xf32>
      %30 = arith.divf %28, %29 : vector<16x1xf32>
      %31 = vector.broadcast %30 : vector<16x1xf32> to vector<16x128xf32>
      %32 = arith.subf %26, %31 : vector<16x128xf32>
      %33 = arith.mulf %32, %32 : vector<16x128xf32>
      %cst_21 = arith.constant dense<0.000000e+00> : vector<16xf32>
      %34 = vector.multi_reduction <add>, %33, %cst_21 [1] : vector<16x128xf32> to vector<16xf32>
      %35 = vector.shape_cast %34 : vector<16xf32> to vector<16x1xf32>
      %cst_22 = arith.constant 1.280000e+02 : f32
      %36 = vector.broadcast %cst_22 : f32 to vector<16x1xf32>
      %37 = arith.divf %35, %36 : vector<16x1xf32>
      %38 = vector.broadcast %30 : vector<16x1xf32> to vector<16x128xf32>
      %39 = arith.subf %26, %38 : vector<16x128xf32>
      %cst_23 = arith.constant 9.99999996E-13 : f32
      %40 = vector.broadcast %cst_23 : f32 to vector<16x1xf32>
      %41 = arith.addf %37, %40 : vector<16x1xf32>
      %42 = math.rsqrt %41 : vector<16x1xf32>
      %43 = vector.broadcast %42 : vector<16x1xf32> to vector<16x128xf32>
      %44 = arith.mulf %39, %43 : vector<16x128xf32>
      %c0_24 = arith.constant 0 : index
      %c0_25 = arith.constant 0 : index
      %45 = vector.load %arg5[%c0_24, %c0_25] : memref<1x128xf32, #tpu.memory_space<vmem>>, vector<1x128xf32>
      %46 = vector.broadcast %45 : vector<1x128xf32> to vector<16x128xf32>
      %47 = arith.mulf %44, %46 : vector<16x128xf32>
      %c0_26 = arith.constant 0 : index
      %c0_27 = arith.constant 0 : index
      %48 = vector.load %arg6[%c0_26, %c0_27] : memref<1x128xf32, #tpu.memory_space<vmem>>, vector<1x128xf32>
      %49 = vector.broadcast %48 : vector<1x128xf32> to vector<16x128xf32>
      %50 = arith.addf %47, %49 : vector<16x128xf32>
      %51 = arith.truncf %50 : vector<16x128xf32> to vector<16x128xbf16>
      %c0_28 = arith.constant 0 : index
      %c0_29 = arith.constant 0 : index
      %52 = vector.load %arg10[%c0_28, %c0_29] : memref<16x128xbf16, #tpu.memory_space<vmem>>, vector<16x128xbf16>
      tpu.vector_store %arg10[%c0_28, %c0_29], %51 {strides = array<i32>} : memref<16x128xbf16, #tpu.memory_space<vmem>>, vector<16x128xbf16>,
    } else {
    }
    %c0 = arith.constant 0 : index
    %c0_1 = arith.constant 0 : index
    %3 = vector.load %arg10[%c0, %c0_1] : memref<16x128xbf16, #tpu.memory_space<vmem>>, vector<16x128xbf16>
    %c0_2 = arith.constant 0 : index
    %c0_3 = arith.constant 0 : index
    %4 = vector.load %arg7[%c0_2, %c0_3] : memref<128x128xbf16, #tpu.memory_space<vmem>>, vector<128x128xbf16>
    %cst = arith.constant dense<0.000000e+00> : vector<16x128xf32>
    %5 = tpu.matmul %3, %4, %cst {dimension_numbers = #tpu.dot_dimension_numbers<[1], [0], [0], [1], [0, 0, 1, 1], [], []>} : vector<16x128xbf16>, vector<128x128xbf16>, vector<16x128xf32> -> vector<16x128xf32>
    %c0_4 = arith.constant 0 : index
    %c0_5 = arith.constant 0 : index
    %6 = vector.load %arg8[%c0_4, %c0_5] : memref<1x128xf32, #tpu.memory_space<vmem>>, vector<1x128xf32>
    %7 = vector.broadcast %6 : vector<1x128xf32> to vector<16x128xf32>
    %8 = arith.addf %5, %7 : vector<16x128xf32>
    %c0_6 = arith.constant 0 : index
    %c0_7 = arith.constant 0 : index
    %9 = vector.load %arg9[%c0_6, %c0_7] : memref<16x128xf32, #tpu.memory_space<vmem>>, vector<16x128xf32>
    tpu.vector_store %arg9[%c0_6, %c0_7], %8 {strides = array<i32>} : memref<16x128xf32, #tpu.memory_space<vmem>>, vector<16x128xf32>,
    return
  }
  func.func @transform_0(%arg0: i32, %arg1: i32) -> (i32, i32) {
    %c0_i32 = arith.constant 0 : i32
    %c0_i32_0 = arith.constant 0 : i32
    return %arg0, %c0_i32 : i32, i32
  }
  func.func @transform_1(%arg0: i32, %arg1: i32) -> (i32, i32) {
    %c0_i32 = arith.constant 0 : i32
    %c0_i32_0 = arith.constant 0 : i32
    %c0_i32_1 = arith.constant 0 : i32
    return %c0_i32, %c0_i32_0 : i32, i32
  }
  func.func @transform_2(%arg0: i32, %arg1: i32) -> (i32, i32) {
    %c0_i32 = arith.constant 0 : i32
    %c0_i32_0 = arith.constant 0 : i32
    %c0_i32_1 = arith.constant 0 : i32
    return %c0_i32, %c0_i32_0 : i32, i32
  }
  func.func @transform_3(%arg0: i32, %arg1: i32) -> (i32, i32) {
    %c0_i32 = arith.constant 0 : i32
    %c0_i32_0 = arith.constant 0 : i32
    %c0_i32_1 = arith.constant 0 : i32
    return %c0_i32, %c0_i32_0 : i32, i32
  }
  func.func @transform_4(%arg0: i32, %arg1: i32) -> (i32, i32) {
    %c0_i32 = arith.constant 0 : i32
    %c0_i32_0 = arith.constant 0 : i32
    %c0_i32_1 = arith.constant 0 : i32
    return %c0_i32, %c0_i32_0 : i32, i32
  }
  func.func @transform_5(%arg0: i32, %arg1: i32) -> (i32, i32) {
    %c0_i32 = arith.constant 0 : i32
    %c0_i32_0 = arith.constant 0 : i32
    return %c0_i32, %arg1 : i32, i32
  }
  func.func @transform_6(%arg0: i32, %arg1: i32) -> (i32, i32) {
    %c0_i32 = arith.constant 0 : i32
    %c0_i32_0 = arith.constant 0 : i32
    return %c0_i32, %arg1 : i32, i32
  }
  func.func @transform_7(%arg0: i32, %arg1: i32) -> (i32, i32) {
    %c0_i32 = arith.constant 0 : i32
    return %arg0, %arg1 : i32, i32
  }
}

</mosaic_0001>

<llo_original>
// kernel: tpu_custom_call.1
$region0: #{tpu_custom_call.1}
  #allocation0 [shape = 'u32[]', space=smem, size = 0x4, offset = 0x4, fixed_abs, tag = 'smem constant byte address 0x4 - core index']
  #allocation1 [shape = 'u32[144,128]{1,0:T(1,128)}', space=vmem, size = 0x12000, scoped, tag = 'internal scratch']
  #allocation2 [shape = 'bf16[16,128]{1,0:T(16,128)(2,1)}', space=vmem, size = 0x1000, scoped, tag = 'scratch operand']
  %s0 = inlined_call_operand.hbm [shape: f32[32,128], index: 0, kind: input, shape index: {}]
  %s1 = inlined_call_operand.hbm [shape: bf16[128,128], index: 1, kind: input, shape index: {}]
  %s2 = inlined_call_operand.vmem [shape: f32[1,128], index: 2, kind: input, shape index: {}]
  %s3 = inlined_call_operand.vmem [shape: f32[1,128], index: 3, kind: input, shape index: {}]
  %s4 = inlined_call_operand.vmem [shape: f32[1,128], index: 4, kind: input, shape index: {}]
  %s5 = inlined_call_operand.hbm [shape: bf16[128,256], index: 5, kind: input, shape index: {}]
  %s6 = inlined_call_operand.vmem [shape: f32[1,256], index: 6, kind: input, shape index: {}]
  %s7 = inlined_call_operand.hbm [shape: f32[32,256], index: 7, kind: output, shape index: {}]
  %s8 = sld [smem:[#allocation0]]
  $region77: #{tpu_custom_call.1} parent=0
    _
  %s10 = ssub.s32 1, %s8
  %s11 = scalar_select 0, %s10, %s8
  $region1: #{tpu_custom_call.1} parent=0
    #allocation3 [shape = 'u8[16384]{0}', space=vmem, size = 0x4000, scoped, tag = 'input window, operand 0']
    #allocation4 [shape = 's32[2]{0}', space=sflag, size = 0x8, scoped, tag = 'scoped memory for tpu_custom_call.1']
    #allocation5 [shape = 's32[2]{0}', space=sflag, size = 0x8, scoped, tag = 'scoped memory for tpu_custom_call.1']
    #allocation6 [shape = 'u8[32768]{0}', space=vmem, size = 0x8000, scoped, tag = 'input window, operand 1, single buffered']
    #allocation7 [shape = 's32[1]{0}', space=sflag, size = 0x4, scoped, tag = 'scoped memory for tpu_custom_call.1']
    #allocation8 [shape = 'u8[65536]{0}', space=vmem, size = 0x10000, scoped, tag = 'input window, operand 5']
    #allocation9 [shape = 'u8[16384]{0}', space=vmem, size = 0x4000, scoped, tag = 'output window, operand 0']
    %12 = vsyncpa [#allocation4], 0
    %s13 = scalar_lea.sflag [#allocation4], 1
    %14 = vsyncpa %s13, 0
    %15 = vsyncpa [#allocation7], 0
    %16 = vsyncpa [#allocation5], 0
    %s17 = scalar_lea.sflag [#allocation5], 1
    %18 = vsyncpa %s17, 0
    loop: start=0, step=1, limit=6
    $region2: #{tpu_custom_call.1} parent=1 // loop_pre_header
      _
    $region3: #{tpu_custom_call.1} parent=1 // loop_header
      %s20 = sphi 0, %s24
      %p21 = scmp.ge.s32.totalorder %s20, 6
      %s27 = sphi 0, %s39
      %s28 = sphi 0, %s35
      %s29 = sphi 0, %s27
      %s30 = sphi 0, %s28
      %s31 = sphi 0, %s29
      %s32 = sphi 0, %s30
      %s42 = sphi 0, %s44
      %s45 = sphi 0, %s42
      %s46 = sphi 0, %s45
      %s62 = sphi 0, %s46
      %s66 = sphi 0, %s66
      %s68 = sphi 0, %s66
      %s69 = sphi 0, %s68
      %s83 = sphi 0, %s69
      %s87 = sphi 0, %s87
      %s89 = sphi 0, %s87
      %s90 = sphi 0, %s89
      %s104 = sphi 0, %s90
      %s108 = sphi 0, %s108
      %s110 = sphi 0, %s108
      %s111 = sphi 0, %s110
      %s125 = sphi 0, %s111
      %s129 = sphi 0, %s129
      %s131 = sphi 0, %s129
      %s132 = sphi 0, %s131
      %s146 = sphi 0, %s132
      %s152 = sphi 0, %s154
      %s155 = sphi 0, %s152
      %s156 = sphi 0, %s155
      %s172 = sphi 0, %s156
      %s178 = sphi 0, %s180
      %s181 = sphi 0, %s178
      %s182 = sphi 0, %s181
      %s198 = sphi 0, %s182
      %s206 = sphi 0, %s208
      %s209 = sphi 0, %s206
      %s210 = sphi 0, %s209
      %s226 = sphi 0, %s210
    $region4: #{tpu_custom_call.1} parent=1 // loop_header_branch
      %23 = sbr.rel (%p21) target = $region8
    $region5: #{tpu_custom_call.1} parent=1 // loop_body
      %s25 = ssub.s32 %s20, 1
      %s26 = ssub.s32 %s20, 2
      %s33 = sadd.s32 1, %s28
      %p34 = scmp.ge.s32.totalorder %s33, 2
      %s35 = scalar_select %p34, 0, %s33
      %s36 = sadd.s32 1, %s27
      %s37 = scalar_select %p34, %s36, %s27
      %p38 = scmp.ge.s32.totalorder %s37, 2
      %s39 = scalar_select %p38, 0, %s37
      %s40 = ssub.s32 %s27, %s39
      %p41 = scmp.eq.s32.totalorder %s40, 0
      %s43 = sadd.s32 %s42, 1
      %s44 = scalar_select %p41, %s42, %s43
      %p47 = pneg %p41
      %p48 = scmp.eq.s32.totalorder %s20, 3
      %p49 = por %p47, %p48
      %p50 = scmp.ne.s32.totalorder %s42, %s45
      %p51 = scmp.eq.s32.totalorder %s20, 0
      %p52 = por %p50, %p51
      %p53 = scmp.ne.s32.totalorder %s42, %s45
      %p54 = scmp.eq.s32.totalorder %s25, 3
      %p55 = por %p53, %p54
      %p56 = scmp.ne.s32.totalorder %s45, %s46
      %p57 = scmp.eq.s32.totalorder %s25, 0
      %p58 = por %p56, %p57
      %p59 = scmp.ne.s32.totalorder %s45, %s46
      %p60 = scmp.eq.s32.totalorder %s26, 3
      %p61 = por %p59, %p60
      %p63 = scmp.ne.s32.totalorder %s46, %s62
      %p64 = scmp.eq.s32.totalorder %s26, 0
      %p65 = por %p63, %p64
      %s67 = sadd.s32 %s66, 1
      %p70 = scmp.eq.s32.totalorder %s20, 3
      %p71 = scmp.ne.s32.totalorder %s66, %s68
      %p72 = scmp.eq.s32.totalorder %s20, 0
      %p73 = por %p71, %p72
      %p74 = scmp.ne.s32.totalorder %s66, %s68
      %p75 = scmp.eq.s32.totalorder %s25, 3
      %p76 = por %p74, %p75
      %p77 = scmp.ne.s32.totalorder %s68, %s69
      %p78 = scmp.eq.s32.totalorder %s25, 0
      %p79 = por %p77, %p78
      %p80 = scmp.ne.s32.totalorder %s68, %s69
      %p81 = scmp.eq.s32.totalorder %s26, 3
      %p82 = por %p80, %p81
      %p84 = scmp.ne.s32.totalorder %s69, %s83
      %p85 = scmp.eq.s32.totalorder %s26, 0
      %p86 = por %p84, %p85
      %s88 = sadd.s32 %s87, 1
      %p91 = scmp.eq.s32.totalorder %s20, 3
      %p92 = scmp.ne.s32.totalorder %s87, %s89
      %p93 = scmp.eq.s32.totalorder %s20, 0
      %p94 = por %p92, %p93
      %p95 = scmp.ne.s32.totalorder %s87, %s89
      %p96 = scmp.eq.s32.totalorder %s25, 3
      %p97 = por %p95, %p96
      %p98 = scmp.ne.s32.totalorder %s89, %s90
      %p99 = scmp.eq.s32.totalorder %s25, 0
      %p100 = por %p98, %p99
      %p101 = scmp.ne.s32.totalorder %s89, %s90
      %p102 = scmp.eq.s32.totalorder %s26, 3
      %p103 = por %p101, %p102
      %p105 = scmp.ne.s32.totalorder %s90, %s104
      %p106 = scmp.eq.s32.totalorder %s26, 0
      %p107 = por %p105, %p106
      %s109 = sadd.s32 %s108, 1
      %p112 = scmp.eq.s32.totalorder %s20, 3
      %p113 = scmp.ne.s32.totalorder %s108, %s110
      %p114 = scmp.eq.s32.totalorder %s20, 0
      %p115 = por %p113, %p114
      %p116 = scmp.ne.s32.totalorder %s108, %s110
      %p117 = scmp.eq.s32.totalorder %s25, 3
      %p118 = por %p116, %p117
      %p119 = scmp.ne.s32.totalorder %s110, %s111
      %p120 = scmp.eq.s32.totalorder %s25, 0
      %p121 = por %p119, %p120
      %p122 = scmp.ne.s32.totalorder %s110, %s111
      %p123 = scmp.eq.s32.totalorder %s26, 3
      %p124 = por %p122, %p123
      %p126 = scmp.ne.s32.totalorder %s111, %s125
      %p127 = scmp.eq.s32.totalorder %s26, 0
      %p128 = por %p126, %p127
      %s130 = sadd.s32 %s129, 1
      %p133 = scmp.eq.s32.totalorder %s20, 3
      %p134 = scmp.ne.s32.totalorder %s129, %s131
      %p135 = scmp.eq.s32.totalorder %s20, 0
      %p136 = por %p134, %p135
      %p137 = scmp.ne.s32.totalorder %s129, %s131
      %p138 = scmp.eq.s32.totalorder %s25, 3
      %p139 = por %p137, %p138
      %p140 = scmp.ne.s32.totalorder %s131, %s132
      %p141 = scmp.eq.s32.totalorder %s25, 0
      %p142 = por %p140, %p141
      %p143 = scmp.ne.s32.totalorder %s131, %s132
      %p144 = scmp.eq.s32.totalorder %s26, 3
      %p145 = por %p143, %p144
      %p147 = scmp.ne.s32.totalorder %s132, %s146
      %p148 = scmp.eq.s32.totalorder %s26, 0
      %p149 = por %p147, %p148
      %s150 = ssub.s32 %s28, %s35
      %p151 = scmp.eq.s32.totalorder %s150, 0
      %s153 = sadd.s32 %s152, 1
      %s154 = scalar_select %p151, %s152, %s153
      %p157 = pneg %p151
      %p158 = scmp.eq.s32.totalorder %s20, 3
      %p159 = por %p157, %p158
      %p160 = scmp.ne.s32.totalorder %s152, %s155
      %p161 = scmp.eq.s32.totalorder %s20, 0
      %p162 = por %p160, %p161
      %p163 = scmp.ne.s32.totalorder %s152, %s155
      %p164 = scmp.eq.s32.totalorder %s25, 3
      %p165 = por %p163, %p164
      %p166 = scmp.ne.s32.totalorder %s155, %s156
      %p167 = scmp.eq.s32.totalorder %s25, 0
      %p168 = por %p166, %p167
      %p169 = scmp.ne.s32.totalorder %s155, %s156
      %p170 = scmp.eq.s32.totalorder %s26, 3
      %p171 = por %p169, %p170
      %p173 = scmp.ne.s32.totalorder %s156, %s172
      %p174 = scmp.eq.s32.totalorder %s26, 0
      %p175 = por %p173, %p174
      %s176 = ssub.s32 %s28, %s35
      %p177 = scmp.eq.s32.totalorder %s176, 0
      %s179 = sadd.s32 %s178, 1
      %s180 = scalar_select %p177, %s178, %s179
      %p183 = pneg %p177
      %p184 = scmp.eq.s32.totalorder %s20, 3
      %p185 = por %p183, %p184
      %p186 = scmp.ne.s32.totalorder %s178, %s181
      %p187 = scmp.eq.s32.totalorder %s20, 0
      %p188 = por %p186, %p187
      %p189 = scmp.ne.s32.totalorder %s178, %s181
      %p190 = scmp.eq.s32.totalorder %s25, 3
      %p191 = por %p189, %p190
      %p192 = scmp.ne.s32.totalorder %s181, %s182
      %p193 = scmp.eq.s32.totalorder %s25, 0
      %p194 = por %p192, %p193
      %p195 = scmp.ne.s32.totalorder %s181, %s182
      %p196 = scmp.eq.s32.totalorder %s26, 3
      %p197 = por %p195, %p196
      %p199 = scmp.ne.s32.totalorder %s182, %s198
      %p200 = scmp.eq.s32.totalorder %s26, 0
      %p201 = por %p199, %p200
      %s202 = ssub.s32 %s27, %s39
      %s203 = ssub.s32 %s28, %s35
      %s204 = sor.u32 %s202, %s203
      %p205 = scmp.eq.s32.totalorder %s204, 0
      %s207 = sadd.s32 %s206, 1
      %s208 = scalar_select %p205, %s206, %s207
      %p211 = pneg %p205
      %p212 = scmp.eq.s32.totalorder %s20, 3
      %p213 = por %p211, %p212
      %p214 = scmp.ne.s32.totalorder %s206, %s209
      %p215 = scmp.eq.s32.totalorder %s20, 0
      %p216 = por %p214, %p215
      %p217 = scmp.ne.s32.totalorder %s206, %s209
      %p218 = scmp.eq.s32.totalorder %s25, 3
      %p219 = por %p217, %p218
      %p220 = scmp.ne.s32.totalorder %s209, %s210
      %p221 = scmp.eq.s32.totalorder %s25, 0
      %p222 = por %p220, %p221
      %p223 = scmp.ne.s32.totalorder %s209, %s210
      %p224 = scmp.eq.s32.totalorder %s26, 3
      %p225 = por %p223, %p224
      %p227 = scmp.ne.s32.totalorder %s210, %s226
      %p228 = scmp.eq.s32.totalorder %s26, 0
      %p229 = por %p227, %p228
      %p230 = scmp.le.s32.totalorder 1, %s20
      %p231 = scmp.lt.s32.totalorder %s20, 5
      %p232 = pnand %p230, %p231
      %p233 = pneg %p232
      // Predicated region
      $region9: #{tpu_custom_call.1} parent=5 // pred_check
        _
      $region10: #{tpu_custom_call.1} parent=5 // pred_check_branch
        %235 = sbr.rel (%p232) target = $region12
      $region11: #{tpu_custom_call.1} parent=5 // pred_region
        %s236 = ssub.s32 %s20, 1
        // Predicated region
        $region13: #{tpu_custom_call.1} parent=11 // pred_check
          %p237 = pneg %p79
        $region14: #{tpu_custom_call.1} parent=11 // pred_check_branch
          %239 = sbr.rel (%p237) target = $region16
        $region15: #{tpu_custom_call.1} parent=11 // pred_region
          %s241 = ssub.s32 1024, 1024
          %242 = vsyncadd [#allocation7], %s241
          %s243 = sshll.u32 [#allocation6], 4
          %s244 = int_to_ptr.vmem [resolvable:$true] %s243
          %249 = dma.hbm_to_vmem [thread:$0]  %s1, 1024, %s244, [#allocation7], 64, 64, 4
        $region16: #{tpu_custom_call.1} parent=11 // pred_fallthru
          _
        // Predicated region
        $region17: #{tpu_custom_call.1} parent=11 // pred_check
          %p250 = pneg %p100
        $region18: #{tpu_custom_call.1} parent=11 // pred_check_branch
          %252 = sbr.rel (%p250) target = $region20
        $region19: #{tpu_custom_call.1} parent=11 // pred_region
          _
        $region20: #{tpu_custom_call.1} parent=11 // pred_fallthru
          _
        // Predicated region
        $region21: #{tpu_custom_call.1} parent=11 // pred_check
          %p253 = pneg %p121
        $region22: #{tpu_custom_call.1} parent=11 // pred_check_branch
          %255 = sbr.rel (%p253) target = $region24
        $region23: #{tpu_custom_call.1} parent=11 // pred_region
          _
        $region24: #{tpu_custom_call.1} parent=11 // pred_fallthru
          _
        // Predicated region
        $region25: #{tpu_custom_call.1} parent=11 // pred_check
          %p256 = pneg %p142
        $region26: #{tpu_custom_call.1} parent=11 // pred_check_branch
          %258 = sbr.rel (%p256) target = $region28
        $region27: #{tpu_custom_call.1} parent=11 // pred_region
          _
        $region28: #{tpu_custom_call.1} parent=11 // pred_fallthru
          _
      $region12: #{tpu_custom_call.1} parent=5 // pred_fallthru
        _
      %p259 = scmp.lt.s32.totalorder %s20, 4
      // Predicated region
      $region29: #{tpu_custom_call.1} parent=5 // pred_check
        %p260 = pneg %p259
      $region30: #{tpu_custom_call.1} parent=5 // pred_check_branch
        %262 = sbr.rel (%p260) target = $region32
      $region31: #{tpu_custom_call.1} parent=5 // pred_region
        // Predicated region
        $region33: #{tpu_custom_call.1} parent=31 // pred_check
          %p263 = pneg %p52
        $region34: #{tpu_custom_call.1} parent=31 // pred_check_branch
          %265 = sbr.rel (%p263) target = $region36
        $region35: #{tpu_custom_call.1} parent=31 // pred_region
          %s266 = sand.u32 %s20, 1
          %s267 = scalar_lea.sflag [#allocation4], %s266
          %s268 = sand.u32 %s42, 1
          %s269 = smul.addr %s268, 16
          %s270 = scalar_lea.vmem [#allocation3], %s269
          %s271 = smul.u32 2, %s27
          %s273 = ssub.s32 256, 256
          %274 = vsyncadd %s267, %s273
          %s275 = smul.addr %s271, 128
          %s276 = scalar_lea.hbm %s0, %s275
          %s277 = sshll.u32 %s270, 4
          %s278 = int_to_ptr.vmem [resolvable:$true] %s277
          %283 = dma.hbm_to_vmem [thread:$0]  %s276, 256, %s278, %s267, 128, 128, 8
        $region36: #{tpu_custom_call.1} parent=31 // pred_fallthru
          _
        // Predicated region
        $region37: #{tpu_custom_call.1} parent=31 // pred_check
          %p284 = pneg %p162
        $region38: #{tpu_custom_call.1} parent=31 // pred_check_branch
          %286 = sbr.rel (%p284) target = $region40
        $region39: #{tpu_custom_call.1} parent=31 // pred_region
          %s287 = sand.u32 %s20, 1
          %s288 = scalar_lea.sflag [#allocation4], %s287
          %s289 = sand.u32 %s152, 1
          %s290 = smul.addr %s289, 64
          %s291 = scalar_lea.vmem [#allocation8], %s290
          %s293 = ssub.s32 1024, 1024
          %294 = vsyncadd %s288, %s293
          %s295 = smul.addr %s28, 64
          %s296 = scalar_lea.hbm %s5, %s295
          %s297 = sshll.u32 %s291, 4
          %s298 = int_to_ptr.vmem [resolvable:$true] %s297
          %303 = dma.hbm_to_vmem [thread:$0]  %s296, 1024, %s298, %s288, 128, 64, 4
        $region40: #{tpu_custom_call.1} parent=31 // pred_fallthru
          _
        // Predicated region
        $region41: #{tpu_custom_call.1} parent=31 // pred_check
          %p304 = pneg %p188
        $region42: #{tpu_custom_call.1} parent=31 // pred_check_branch
          %306 = sbr.rel (%p304) target = $region44
        $region43: #{tpu_custom_call.1} parent=31 // pred_region
          %p307 = scmp.lt.s32.totalorder %s28, 1
          %s308 = scalar_select %p307, %s28, 1
          %s309 = scalar_lea.vmem %s6, %s308
        $region44: #{tpu_custom_call.1} parent=31 // pred_fallthru
          _
      $region32: #{tpu_custom_call.1} parent=5 // pred_fallthru
        _
      %p310 = scmp.le.s32.totalorder 1, %s20
      %p311 = scmp.lt.s32.totalorder %s20, 5
      %p312 = pnand %p310, %p311
      %p313 = pneg %p312
      // Predicated region
      $region45: #{tpu_custom_call.1} parent=5 // pred_check
        _
      $region46: #{tpu_custom_call.1} parent=5 // pred_check_branch
        %315 = sbr.rel (%p312) target = $region48
      $region47: #{tpu_custom_call.1} parent=5 // pred_region
        %s316 = ssub.s32 %s20, 1
        %s317 = sand.u32 %s25, 1
        %s318 = scalar_lea.sflag [#allocation4], %s317
        %s319 = sand.u32 %s45, 1
        %s320 = smul.addr %s319, 16
        %s321 = scalar_lea.vmem [#allocation3], %s320
        // Predicated region
        $region49: #{tpu_custom_call.1} parent=47 // pred_check
          %p322 = pneg %p58
        $region50: #{tpu_custom_call.1} parent=47 // pred_check_branch
          %324 = sbr.rel (%p322) target = $region52
        $region51: #{tpu_custom_call.1} parent=47 // pred_region
          %325 = dma.done %s318, 256
        $region52: #{tpu_custom_call.1} parent=47 // pred_fallthru
          _
        // Predicated region
        $region53: #{tpu_custom_call.1} parent=47 // pred_check
          %p326 = pneg %p79
        $region54: #{tpu_custom_call.1} parent=47 // pred_check_branch
          %328 = sbr.rel (%p326) target = $region56
        $region55: #{tpu_custom_call.1} parent=47 // pred_region
          %329 = dma.done [#allocation7], 1024
        $region56: #{tpu_custom_call.1} parent=47 // pred_fallthru
          _
        %s330 = sand.u32 %s25, 1
        %s331 = scalar_lea.sflag [#allocation4], %s330
        %s332 = sand.u32 %s155, 1
        %s333 = smul.addr %s332, 64
        %s334 = scalar_lea.vmem [#allocation8], %s333
        // Predicated region
        $region57: #{tpu_custom_call.1} parent=47 // pred_check
          %p335 = pneg %p168
        $region58: #{tpu_custom_call.1} parent=47 // pred_check_branch
          %337 = sbr.rel (%p335) target = $region60
        $region59: #{tpu_custom_call.1} parent=47 // pred_region
          %338 = dma.done %s331, 1024
        $region60: #{tpu_custom_call.1} parent=47 // pred_fallthru
          _
        %s339 = sand.u32 %s25, 1
        %s340 = scalar_lea.sflag [#allocation4], %s339
        %s341 = sand.u32 %s45, 1
        %s342 = smul.addr %s341, 16
        %s343 = scalar_lea.vmem [#allocation3], %s342
        %p344 = pneg %p58
        %p345 = pneg %p55
        %p346 = pneg %p79
        %p347 = pneg %p76
        %p348 = pneg %p100
        %p349 = pneg %p97
        %p350 = pneg %p121
        %p351 = pneg %p118
        %p352 = pneg %p142
        %p353 = pneg %p139
        %s354 = sand.u32 %s25, 1
        %s355 = scalar_lea.sflag [#allocation4], %s354
        %s356 = sand.u32 %s155, 1
        %s357 = smul.addr %s356, 64
        %s358 = scalar_lea.vmem [#allocation8], %s357
        %p359 = pneg %p168
        %p360 = pneg %p165
        %p361 = scmp.lt.s32.totalorder %s30, 1
        %s362 = scalar_select %p361, %s30, 1
        %s363 = scalar_lea.vmem %s6, %s362
        %p364 = pneg %p194
        %p365 = pneg %p191
        %p366 = pneg %p222
        %p367 = pneg %p219
        %s368 = sand.u32 %s209, 1
        %s369 = scalar_lea.sflag [#allocation5], %s368
        %s370 = sand.u32 %s209, 1
        %s371 = smul.addr %s370, 16
        %s372 = scalar_lea.vmem [#allocation9], %s371
        %s373 = smul.u32 2, %s29
        %p374 = scmp.lt.s32.totalorder %s30, 1
        %s375 = scalar_select %p374, %s30, 1
        %s376 = scalar_lea.vmem %s6, %s375
        %s377 = smul.u32 2, %s29
        %p379 = scmp.eq.s32.totalorder %s30, 0
        // Predicated region
        $region61: #{tpu_custom_call.1} parent=47 // pred_check
          %p380 = pneg %p379
        $region62: #{tpu_custom_call.1} parent=47 // pred_check_branch
          %382 = sbr.rel (%p380) target = $region64
        $region63: #{tpu_custom_call.1} parent=47 // pred_region
          %v383 = vld [vmem:[%s321] sm:$0xff]
          %v384 = vld [vmem:[%s321 + $0x8] sm:$0xff]
          %v385 = vpack.c.bf16 %v384, %v383
          %v386 = vld [vmem:[#allocation6] sm:$0xf]
          %v387 = vld [vmem:[#allocation6 + $0x4] sm:$0xf]
          %v388 = vld [vmem:[#allocation6 + $0x8] sm:$0xf]
          %v389 = vld [vmem:[#allocation6 + $0xc] sm:$0xf]
          %v390 = vld [vmem:[#allocation6 + $0x10] sm:$0xf]
          %v391 = vld [vmem:[#allocation6 + $0x14] sm:$0xf]
          %v392 = vld [vmem:[#allocation6 + $0x18] sm:$0xf]
          %v393 = vld [vmem:[#allocation6 + $0x1c] sm:$0xf]
          %v394 = vld [vmem:[#allocation6 + $0x20] sm:$0xf]
          %v395 = vld [vmem:[#allocation6 + $0x24] sm:$0xf]
          %v396 = vld [vmem:[#allocation6 + $0x28] sm:$0xf]
          %v397 = vld [vmem:[#allocation6 + $0x2c] sm:$0xf]
          %v398 = vld [vmem:[#allocation6 + $0x30] sm:$0xf]
          %v399 = vld [vmem:[#allocation6 + $0x34] sm:$0xf]
          %v400 = vld [vmem:[#allocation6 + $0x38] sm:$0xf]
          %v401 = vld [vmem:[#allocation6 + $0x3c] sm:$0xf]
          %v402 = vld [vmem:[%s2] sm:$0x1]
          %v404 = vlaneseq
          %v405 = vshrl.u32 %v404, 7
          %v406 = vsub.s32 0, %v405
          %v407 = vrot.slane %v402, %v406
          %v425 = vunpack.c.l.b16 %v386
          %v426 = vunpack.c.l.b16 %v387
          %v427 = vunpack.c.l.b16 %v388
          %v428 = vunpack.c.l.b16 %v389
          %v429 = vunpack.c.l.b16 %v390
          %v430 = vunpack.c.l.b16 %v391
          %v431 = vunpack.c.l.b16 %v392
          %v432 = vunpack.c.l.b16 %v393
          %v433 = vunpack.c.l.b16 %v394
          %v434 = vunpack.c.l.b16 %v395
          %v435 = vunpack.c.l.b16 %v396
          %v436 = vunpack.c.l.b16 %v397
          %v437 = vunpack.c.l.b16 %v398
          %v438 = vunpack.c.l.b16 %v399
          %v439 = vunpack.c.l.b16 %v400
          %v440 = vunpack.c.l.b16 %v401
          %v441 = vpack.c.b16 %v426, %v425
          %v442 = vpack.c.b16 %v428, %v427
          %v443 = vpack.c.b16 %v430, %v429
          %v444 = vpack.c.b16 %v432, %v431
          %v445 = vpack.c.b16 %v434, %v433
          %v446 = vpack.c.b16 %v436, %v435
          %v447 = vpack.c.b16 %v438, %v437
          %v448 = vpack.c.b16 %v440, %v439
          %457 = vmatprep.subr.bf16.mxu0 0
          %458 = vmatpush1.bf16.msra.mxu0 %v441
          %459 = vmatprep.subr.bf16.mxu0 0
          %460 = vmatpush1.bf16.msra.mxu0 %v442
          %461 = vmatprep.subr.bf16.mxu0 0
          %462 = vmatpush1.bf16.msra.mxu0 %v443
          %463 = vmatprep.subr.bf16.mxu0 0
          %464 = vmatpush1.bf16.msra.mxu0 %v444
          %465 = vmatprep.subr.bf16.mxu0 0
          %466 = vmatpush1.bf16.msra.mxu0 %v445
          %467 = vmatprep.subr.bf16.mxu0 0
          %468 = vmatpush1.bf16.msra.mxu0 %v446
          %469 = vmatprep.subr.bf16.mxu0 0
          %470 = vmatpush1.bf16.msra.mxu0 %v447
          %471 = vmatprep.subr.bf16.mxu0 0
          %472 = vmatpush1.bf16.msra.mxu0 %v448
          %473 = vmatprep.subr.bf16.mxu0 0
          %474 = vmatpush1.bf16.msra.mxu0 0
          %475 = vmatprep.subr.bf16.mxu0 0
          %476 = vmatpush1.bf16.msra.mxu0 0
          %477 = vmatprep.subr.bf16.mxu0 0
          %478 = vmatpush1.bf16.msra.mxu0 0
          %479 = vmatprep.subr.bf16.mxu0 0
          %480 = vmatpush1.bf16.msra.mxu0 0
          %481 = vmatprep.subr.bf16.mxu0 0
          %482 = vmatpush1.bf16.msra.mxu0 0
          %483 = vmatprep.subr.bf16.mxu0 0
          %484 = vmatpush1.bf16.msra.mxu0 0
          %485 = vmatprep.subr.bf16.mxu0 0
          %486 = vmatpush1.bf16.msra.mxu0 0
          %487 = vmatprep.subr.bf16.mxu0 0
          %488 = vmatpush1.bf16.msra.mxu0 0
          %489 = vmatprep.mubr.bf16.mxu0 0
          %490 = vmatmul.mubr.bf16.gmra.mrb[0].mxu0 %v385
          %v491 = vpop.f32.mrb[0].mxu0
          %v492 = vadd.f32 %v407, %v491
          %v493 = vpop.f32.mrb[0].mxu0
          %v494 = vpop.f32.mrb[0].mxu0
          %v495 = vadd.f32 %v407, %v494
          %v496 = vpop.f32.mrb[0].mxu0
          %497 = vdwg.mxu0
          %v498 = vmul.f32 %v492, 0.5
          %v499 = vmul.f32 %v495, 0.5
          %v500 = vmul.f32 %v492, 0.70710677
          %v501 = vmul.f32 %v495, 0.70710677
          %v502 = verf.f32.pop %v500
          %v503 = verf.f32.pop %v501
          %v504 = vadd.f32 %v502, 1.0
          %v505 = vadd.f32 %v503, 1.0
          %v506 = vmul.f32 %v498, %v504
          %v507 = vmul.f32 %v499, %v505
          %508 = vadd.xlane.f32.xlu0 %v506
          %v509 = vpop.xlane.xlu0 %508
          %510 = vadd.xlane.f32.xlu0 %v507
          %v511 = vpop.xlane.xlu0 %510
          %v512 = vrcp.pop 128.0
          %v513 = vmul.f32 %v509, %v512
          %v514 = vmul.f32 %v511, %v512
          %v515 = vsub.f32 %v506, %v513
          %v516 = vsub.f32 %v507, %v514
          %v517 = vmul.f32 %v515, %v515
          %v518 = vmul.f32 %v516, %v516
          %519 = vadd.xlane.f32.xlu0 %v517
          %v520 = vpop.xlane.xlu0 %519
          %521 = vadd.xlane.f32.xlu0 %v518
          %v522 = vpop.xlane.xlu0 %521
          %v523 = vmul.f32 %v520, %v512
          %v524 = vmul.f32 %v522, %v512
          %v525 = vadd.f32 %v523, 1e-12
          %v526 = vadd.f32 %v524, 1e-12
          %v527 = vrsqrt.pop %v525
          %v528 = vrsqrt.pop %v526
          %v529 = vmul.f32 %v515, %v527
          %v530 = vmul.f32 %v516, %v528
          %v531 = vld [vmem:[%s3] sm:$0x1]
          %v533 = vlaneseq
          %v534 = vshrl.u32 %v533, 7
          %v535 = vsub.s32 0, %v534
          %v536 = vrot.slane %v531, %v535
          %v538 = vmul.f32 %v529, %v536
          %v539 = vmul.f32 %v530, %v536
          %v540 = vld [vmem:[%s4] sm:$0x1]
          %v542 = vlaneseq
          %v543 = vshrl.u32 %v542, 7
          %v544 = vsub.s32 0, %v543
          %v545 = vrot.slane %v540, %v544
          %v547 = vadd.f32 %v538, %v545
          %v548 = vadd.f32 %v539, %v545
          %v549 = vpack.c.bf16 %v548, %v547
          %550 = vst [vmem:[#allocation2] sm:$0xff] %v549
        $region64: #{tpu_custom_call.1} parent=47 // pred_fallthru
          _
        %v551 = vld [vmem:[#allocation2] sm:$0xff]
        %v552 = vld [vmem:[%s334] sm:$0xf]
        %v553 = vld [vmem:[%s334 + $0x4] sm:$0xf]
        %v554 = vld [vmem:[%s334 + $0x8] sm:$0xf]
        %v555 = vld [vmem:[%s334 + $0xc] sm:$0xf]
        %v556 = vld [vmem:[%s334 + $0x10] sm:$0xf]
        %v557 = vld [vmem:[%s334 + $0x14] sm:$0xf]
        %v558 = vld [vmem:[%s334 + $0x18] sm:$0xf]
        %v559 = vld [vmem:[%s334 + $0x1c] sm:$0xf]
        %v560 = vld [vmem:[%s334 + $0x20] sm:$0xf]
        %v561 = vld [vmem:[%s334 + $0x24] sm:$0xf]
        %v562 = vld [vmem:[%s334 + $0x28] sm:$0xf]
        %v563 = vld [vmem:[%s334 + $0x2c] sm:$0xf]
        %v564 = vld [vmem:[%s334 + $0x30] sm:$0xf]
        %v565 = vld [vmem:[%s334 + $0x34] sm:$0xf]
        %v566 = vld [vmem:[%s334 + $0x38] sm:$0xf]
        %v567 = vld [vmem:[%s334 + $0x3c] sm:$0xf]
        %v568 = vld [vmem:[%s376] sm:$0x1]
        %v570 = vlaneseq
        %v571 = vshrl.u32 %v570, 7
        %v572 = vsub.s32 0, %v571
        %v573 = vrot.slane %v568, %v572
        %v591 = vunpack.c.l.b16 %v552
        %v592 = vunpack.c.l.b16 %v553
        %v593 = vunpack.c.l.b16 %v554
        %v594 = vunpack.c.l.b16 %v555
        %v595 = vunpack.c.l.b16 %v556
        %v596 = vunpack.c.l.b16 %v557
        %v597 = vunpack.c.l.b16 %v558
        %v598 = vunpack.c.l.b16 %v559
        %v599 = vunpack.c.l.b16 %v560
        %v600 = vunpack.c.l.b16 %v561
        %v601 = vunpack.c.l.b16 %v562
        %v602 = vunpack.c.l.b16 %v563
        %v603 = vunpack.c.l.b16 %v564
        %v604 = vunpack.c.l.b16 %v565
        %v605 = vunpack.c.l.b16 %v566
        %v606 = vunpack.c.l.b16 %v567
        %v607 = vpack.c.b16 %v592, %v591
        %v608 = vpack.c.b16 %v594, %v593
        %v609 = vpack.c.b16 %v596, %v595
        %v610 = vpack.c.b16 %v598, %v597
        %v611 = vpack.c.b16 %v600, %v599
        %v612 = vpack.c.b16 %v602, %v601
        %v613 = vpack.c.b16 %v604, %v603
        %v614 = vpack.c.b16 %v606, %v605
        %623 = vmatprep.subr.bf16.mxu0 0
        %624 = vmatpush1.bf16.msra.mxu0 %v607
        %625 = vmatprep.subr.bf16.mxu0 0
        %626 = vmatpush1.bf16.msra.mxu0 %v608
        %627 = vmatprep.subr.bf16.mxu0 0
        %628 = vmatpush1.bf16.msra.mxu0 %v609
        %629 = vmatprep.subr.bf16.mxu0 0
        %630 = vmatpush1.bf16.msra.mxu0 %v610
        %631 = vmatprep.subr.bf16.mxu0 0
        %632 = vmatpush1.bf16.msra.mxu0 %v611
        %633 = vmatprep.subr.bf16.mxu0 0
        %634 = vmatpush1.bf16.msra.mxu0 %v612
        %635 = vmatprep.subr.bf16.mxu0 0
        %636 = vmatpush1.bf16.msra.mxu0 %v613
        %637 = vmatprep.subr.bf16.mxu0 0
        %638 = vmatpush1.bf16.msra.mxu0 %v614
        %639 = vmatprep.subr.bf16.mxu0 0
        %640 = vmatpush1.bf16.msra.mxu0 0
        %641 = vmatprep.subr.bf16.mxu0 0
        %642 = vmatpush1.bf16.msra.mxu0 0
        %643 = vmatprep.subr.bf16.mxu0 0
        %644 = vmatpush1.bf16.msra.mxu0 0
        %645 = vmatprep.subr.bf16.mxu0 0
        %646 = vmatpush1.bf16.msra.mxu0 0
        %647 = vmatprep.subr.bf16.mxu0 0
        %648 = vmatpush1.bf16.msra.mxu0 0
        %649 = vmatprep.subr.bf16.mxu0 0
        %650 = vmatpush1.bf16.msra.mxu0 0
        %651 = vmatprep.subr.bf16.mxu0 0
        %652 = vmatpush1.bf16.msra.mxu0 0
        %653 = vmatprep.subr.bf16.mxu0 0
        %654 = vmatpush1.bf16.msra.mxu0 0
        %655 = vmatprep.mubr.bf16.mxu0 0
        %656 = vmatmul.mubr.bf16.gmra.mrb[0].mxu0 %v551
        %v657 = vpop.f32.mrb[0].mxu0
        %v658 = vadd.f32 %v573, %v657
        %v659 = vpop.f32.mrb[0].mxu0
        %v660 = vpop.f32.mrb[0].mxu0
        %v661 = vadd.f32 %v573, %v660
        %v662 = vpop.f32.mrb[0].mxu0
        %663 = vdwg.mxu0
        %664 = vst [vmem:[%s372] sm:$0xff] %v658
        %665 = vst [vmem:[%s372 + $0x8] sm:$0xff] %v661
        %s666 = sand.u32 %s209, 1
        %s667 = scalar_lea.sflag [#allocation5], %s666
        %s668 = sand.u32 %s209, 1
        %s669 = smul.addr %s668, 16
        %s670 = scalar_lea.vmem [#allocation9], %s669
        // Predicated region
        $region65: #{tpu_custom_call.1} parent=47 // pred_check
          %p671 = pneg %p219
        $region66: #{tpu_custom_call.1} parent=47 // pred_check_branch
          %673 = sbr.rel (%p671) target = $region68
        $region67: #{tpu_custom_call.1} parent=47 // pred_region
          %s674 = smul.u32 2, %s29
          %s676 = ssub.s32 256, 256
          %677 = vsyncadd %s667, %s676
          %s678 = smul.addr %s674, 2
          %s679 = sadd.s32 %s30, %s678
          %s680 = smul.addr %s679, 128
          %s681 = scalar_lea.hbm %s7, %s680
          %s682 = sshll.u32 %s670, 4
          %s683 = int_to_ptr.vmem [resolvable:$true] %s682
          %688 = dma.vmem_to_hbm [thread:$0]  %s683, 256, %s681, %s667, 128, 256, 8
        $region68: #{tpu_custom_call.1} parent=47 // pred_fallthru
          _
      $region48: #{tpu_custom_call.1} parent=5 // pred_fallthru
        _
      %p689 = scmp.le.s32.totalorder 2, %s20
      // Predicated region
      $region69: #{tpu_custom_call.1} parent=5 // pred_check
        %p690 = pneg %p689
      $region70: #{tpu_custom_call.1} parent=5 // pred_check_branch
        %692 = sbr.rel (%p690) target = $region72
      $region71: #{tpu_custom_call.1} parent=5 // pred_region
        %s693 = ssub.s32 %s20, 2
        // Predicated region
        $region73: #{tpu_custom_call.1} parent=71 // pred_check
          %p694 = pneg %p225
        $region74: #{tpu_custom_call.1} parent=71 // pred_check_branch
          %696 = sbr.rel (%p694) target = $region76
        $region75: #{tpu_custom_call.1} parent=71 // pred_region
          %s697 = sand.u32 %s210, 1
          %s698 = scalar_lea.sflag [#allocation5], %s697
          %s699 = sand.u32 %s210, 1
          %s700 = smul.addr %s699, 16
          %s701 = scalar_lea.vmem [#allocation9], %s700
          %702 = dma.done %s698, 256
        $region76: #{tpu_custom_call.1} parent=71 // pred_fallthru
          _
      $region72: #{tpu_custom_call.1} parent=5 // pred_fallthru
        _
    $region6: #{tpu_custom_call.1} parent=1 // loop_footer
      %s24 = sadd.s32 1, %s20
    $region7: #{tpu_custom_call.1} parent=1 // loop_footer_branch
      %19 = sbr.rel target = $region3
    $region8: #{tpu_custom_call.1} parent=1 // loop_exit
      _
    %703 = vsyncpa [#allocation4], 1
    %s704 = scalar_lea.sflag [#allocation4], 1
    %705 = vsyncpa %s704, 1
    %706 = vsyncpa [#allocation7], 1
    %707 = vsyncpa [#allocation5], 1
    %s708 = scalar_lea.sflag [#allocation5], 1
    %709 = vsyncpa %s708, 1

</llo_original>
